<compile_context>
chip_gen: v5e
topology: v5e:2x2
jax: 0.10.0
libtpu: 0.0.40
codegen_flags: <defaults>
</compile_context>

<pallas_src>
import functools

import jax
import jax.numpy as jnp
from jax.experimental import pallas as pl
from jax.experimental.pallas import tpu as pltpu

_MID = 256  # classifier hidden width (nn.Linear(H, 256))


# --------------------------------------------------------------------------------------
# Phase 1: streamed sequence pooling -> per-core partial sums [2, B, H] (f32)
# --------------------------------------------------------------------------------------
def _pool_kernel(h_ref, part_ref, *, seq_len, ts, tb, gs, gs2, ragged, use_mxu):
    """h_ref: [TB, TS, H] chunk; part_ref: [TB, H] f32 resident output block (accumulator)."""
    c = pl.program_id(0)           # sequence half (split across TensorCores on v7x)
    s = pl.program_id(2)           # sequence chunk within the half
    chunk_idx = c * gs2 + s        # global (intended) sequence-chunk index

    @pl.when(s == 0)
    def _():
        part_ref[...] = jnp.zeros_like(part_ref)

    def accumulate(data):
        if use_mxu:
            # MXU ones-contraction: folds the dtype cast into the matmul's f32 accumulation
            # and keeps the VPU free (v7x bf16 would otherwise be VALU-bound).
            ones_row = jnp.ones((1, ts), data.dtype)
            for b in range(tb):                       # TB <= 16, unrolled 2-D MXU dots
                part_ref[b:b + 1, :] += jnp.dot(
                    ones_row, data[b], preferred_element_type=jnp.float32)
        else:
            # f32 path: plain VPU accumulate (no cast needed), ~1 VALU op / element.
            part_ref[...] += data.astype(jnp.float32).sum(axis=1)

    if ragged:
        # Only the boundary chunk (ragged tail) / phantom chunk (odd chunk count after the
        # 2-way core split) pays for masking; all other chunks take the unmasked hot path.
        @pl.when(chunk_idx < gs - 1)
        def _():
            accumulate(h_ref[...])

        @pl.when(chunk_idx >= gs - 1)
        def _():
            data = h_ref[...]
            rows = jax.lax.broadcasted_iota(jnp.int32, (1, ts, 1), 1)
            valid = (chunk_idx * ts + rows) < seq_len
            # select (not multiply) so OOB garbage -- even NaN -- cannot leak into the sum.
            accumulate(jnp.where(valid, data, jnp.zeros_like(data)))
    else:
        accumulate(h_ref[...])


# --------------------------------------------------------------------------------------
# Phase 2: merge partials + classifier MLP  (tiny; [B, H] scale work)
# --------------------------------------------------------------------------------------
def _head_kernel(part_ref, w1_ref, b1_ref, w2_ref, b2_ref, out_ref, *, inv_seq_len):
    """part_ref: [2, TBf, H] f32; w1: [H, 256]; b1/w2: [1, 256]; b2: SMEM [1,1]; out: [TBf, 1]."""
    pooled = (part_ref[0] + part_ref[1]) * inv_seq_len            # mean over true S, f32

    # Linear(H, 256) on the MXU.
    z1 = jnp.dot(pooled, w1_ref[...], preferred_element_type=jnp.float32)
    z1 = z1 + b1_ref[...]                                         # [1, 256] broadcast

    # LeakyReLU(negative_slope=0.2) on the VPU.
    z1 = jnp.where(z1 > 0, z1, 0.2 * z1)

    # Linear(256, 1) as a VPU multiply + lane reduction (W2 passed as a [1, 256] row).
    out = jnp.sum(z1 * w2_ref[...], axis=-1, keepdims=True) + b2_ref[0, 0]
    out_ref[...] = out.astype(out_ref.dtype)


# --------------------------------------------------------------------------------------
# Tiling / budgeting helpers (generation-aware)
# --------------------------------------------------------------------------------------
def _vmem_capacity_bytes():
    try:
        cap = int(pltpu.get_tpu_info().vmem_capacity_bytes)
        if cap >= (16 << 20):
            return cap
    except Exception:
        pass
    return 64 << 20  # conservative default (v7x)


def _pick_ts(S, align, rows_budget):
    """Largest dtype-aligned sequence tile <= rows_budget, preferring a divisor of S."""
    if S <= rows_budget:
        return S
    top = (rows_budget // align) * align
    if top < align:
        return align
    floor_t = max(align, ((top // 2) // align) * align)
    t = top
    while t >= floor_t:                 # prefer a divisor of S -> no tail masking at all
        if S % t == 0:
            return t
        t -= align
    return top                          # fall back to masked ragged tail


def _pick_tiles(B, S, H, itemsize, vmem_cap, max_seq_tile=None):
    # Batch tile: full batch when tiny; raise above 8 for large B to amortize step overhead.
    TB = B if B <= 8 else min(16, (B // 8) * 8)
    # Dtype-aware sublane alignment: f32 -> 8, bf16 -> 16, 1-byte -> 32.
    align = {4: 8, 2: 16, 1: 32}.get(itemsize, 8)
    # Per-in-flight-buffer byte budget derived from this generation's VMEM capacity.
    reserve = 2 * TB * H * 4 + (4 << 20)                     # resident f32 out block + headroom
    per_buf_cap = (20 << 20) if vmem_cap >= (96 << 20) else (10 << 20)
    stream_total = max(4 << 20, int(0.6 * vmem_cap) - reserve)
    per_buf = max(2 << 20, min(per_buf_cap, stream_total // 2))
    rows_budget = max(align, per_buf // max(1, TB * H * itemsize))
    if max_seq_tile is not None:
        rows_budget = min(rows_budget, max_seq_tile)
    TS = _pick_ts(S, align, rows_budget)
    return TB, TS


def _pick_tbf(B, H, mid, vmem_cap):
    if B <= 8:
        return B
    tbf = min(64, (B // 8) * 8)

    def need(t):
        return 2 * (2 * t * H * 4) + 2 * H * mid * 4 + 2 * t * mid * 4 + (2 << 20)

    while tbf > 8 and need(tbf) > int(0.7 * vmem_cap):
        tbf = max(8, ((tbf // 2) // 8) * 8)
    return tbf


# --------------------------------------------------------------------------------------
# Wrapper
# --------------------------------------------------------------------------------------
def mol2ms_discriminator(hidden_state, w1, b1, w2, b2, *, max_seq_tile=None):
    """hidden_state: [B, S, H]; w1: [H, 256]; b1: [256]/[1,256]; w2: [256,1]; b2: [1]/[1,1]."""
    B, S, H = hidden_state.shape
    mid = w1.shape[1]

    # Classifier weights are tiny; keep them f32 (matches the PyTorch f32 classifier).
    w1 = w1.astype(jnp.float32)
    b1 = jnp.reshape(b1, (1, mid)).astype(jnp.float32)
    w2_row = jnp.reshape(w2, (1, mid)).astype(jnp.float32)
    b2 = jnp.reshape(b2, (1, 1)).astype(jnp.float32)

    itemsize = jnp.dtype(hidden_state.dtype).itemsize
    vmem_cap = _vmem_capacity_bytes()
    TB, TS = _pick_tiles(B, S, H, itemsize, vmem_cap, max_seq_tile)

    gb = pl.cdiv(B, TB)
    gs = pl.cdiv(S, TS)          # total sequence chunks
    gs2 = pl.cdiv(gs, 2)         # chunks per sequence half (core-split axis)
    ragged = (S % TS != 0) or (gs % 2 != 0)
    use_mxu = jnp.issubdtype(hidden_state.dtype, jnp.floating) and itemsize < 4

    # ---- Phase 1: streamed partial mean-pool sums -------------------------------------
    chunk_bytes = TB * TS * H * itemsize
    need1 = 2 * chunk_bytes + 2 * TB * H * 4 + (2 << 20)
    vmem_limit1 = int(min(int(0.85 * vmem_cap), max(32 << 20, need1 + (4 << 20))))

    pool_kernel = functools.partial(
        _pool_kernel, seq_len=S, ts=TS, tb=TB, gs=gs, gs2=gs2,
        ragged=ragged, use_mxu=use_mxu)

    partial = pl.pallas_call(
        pool_kernel,
        out_shape=jax.ShapeDtypeStruct((2, B, H), jnp.float32),
        grid=(2, gb, gs2),
        in_specs=[
            # Big activation stream: auto double-buffered; the sequence-block index is clamped
            # so the (at most one) phantom chunk of the odd-length split re-reads real data,
            # whose contribution is masked to zero in-kernel.
            pl.BlockSpec((TB, TS, H),
                         lambda c, b, s: (b, jnp.minimum(c * gs2 + s, gs - 1), 0)),
        ],
        # Resident f32 output block doubles as the accumulator (index constant over s).
        out_specs=pl.BlockSpec((None, TB, H), lambda c, b, s: (c, b, 0)),
        compiler_params=pltpu.CompilerParams(
            dimension_semantics=("parallel", "parallel", "arbitrary"),
            vmem_limit_bytes=vmem_limit1,
        ),
    )(hidden_state)

    # ---- Phase 2: merge halves + classifier MLP ----------------------------------------
    TBf = _pick_tbf(B, H, mid, vmem_cap)
    need2 = 2 * (2 * TBf * H * 4) + 2 * H * mid * 4 + 2 * TBf * mid * 4 + (2 << 20)
    vmem_limit2 = int(min(int(0.85 * vmem_cap), max(32 << 20, need2 + (4 << 20))))

    head_kernel = functools.partial(_head_kernel, inv_seq_len=1.0 / S)

    return pl.pallas_call(
        head_kernel,
        out_shape=jax.ShapeDtypeStruct((B, 1), jnp.float32),
        grid=(pl.cdiv(B, TBf),),
        in_specs=[
            pl.BlockSpec((2, TBf, H), lambda i: (0, i, 0)),
            # Small weights: constant index maps -> fetched once, resident in VMEM.
            pl.BlockSpec((H, mid), lambda i: (0, 0)),
            pl.BlockSpec((1, mid), lambda i: (0, 0)),
            pl.BlockSpec((1, mid), lambda i: (0, 0)),
            # Scalar bias lives in SMEM.
            pl.BlockSpec(memory_space=pltpu.MemorySpace.SMEM),
        ],
        out_specs=pl.BlockSpec((TBf, 1), lambda i: (i, 0)),
        compiler_params=pltpu.CompilerParams(
            dimension_semantics=("parallel",),
            vmem_limit_bytes=vmem_limit2,
        ),
    )(partial, w1, b1, w2_row, b2)


def init_params(key, hidden_size, mid=_MID):
    """Deterministic PyTorch-style (kaiming-uniform) Linear init; weights stored as [in, out]."""
    k1, k2, k3, k4 = jax.random.split(key, 4)
    bound1 = 1.0 / (hidden_size ** 0.5)
    bound2 = 1.0 / (mid ** 0.5)
    w1 = jax.random.uniform(k1, (hidden_size, mid), jnp.float32, -bound1, bound1)
    b1 = jax.random.uniform(k2, (1, mid), jnp.float32, -bound1, bound1)
    w2 = jax.random.uniform(k3, (mid, 1), jnp.float32, -bound2, bound2)
    b2 = jax.random.uniform(k4, (1, 1), jnp.float32, -bound2, bound2)
    return w1, b1, w2, b2


if __name__ == "__main__":
    key = jax.random.PRNGKey(0)
    k_in, k_params, k2, k3 = jax.random.split(key, 4)

    def reference(hs, w1, b1, w2, b2):
        pooled = hs.astype(jnp.float32).mean(axis=1)
        z = pooled @ w1 + b1.reshape(1, -1)
        z = jnp.where(z > 0, z, 0.2 * z)
        return z @ w2.reshape(-1, 1) + b2.reshape(1, 1)

    H = 32  # base_model.config.hidden_size = 32
    w1, b1, w2, b2 = init_params(k_params, H)

    # Case 1: canonical small shapes (batch=2, seq=8, hidden=32), f32.
    B, S = 2, 8
    hs = jax.random.normal(k_in, (B, S, H), jnp.float32)
    out = jax.block_until_ready(mol2ms_discriminator(hs, w1, b1, w2, b2))
    assert out.shape == (B, 1)
    assert jnp.allclose(out, reference(hs, w1, b1, w2, b2), atol=1e-5, rtol=1e-5)

    # Case 2: ragged sequence tail + odd chunk count (exercises tail mask and phantom chunk).
    B, S = 2, 44
    hs = jax.random.normal(k2, (B, S, H), jnp.float32)
    out = jax.block_until_ready(mol2ms_discriminator(hs, w1, b1, w2, b2, max_seq_tile=16))
    assert jnp.allclose(out, reference(hs, w1, b1, w2, b2), atol=1e-4, rtol=1e-4)

    # Case 3: bf16 activations -> MXU ones-contraction pooling path.
    hs16 = hs.astype(jnp.bfloat16)
    out = jax.block_until_ready(mol2ms_discriminator(hs16, w1, b1, w2, b2, max_seq_tile=16))
    assert jnp.allclose(out, reference(hs16, w1, b1, w2, b2), atol=1e-2, rtol=1e-2)

    # Case 4: batch larger than the batch tile (ragged batch tail), default tiling.
    B, S = 10, 24
    hs = jax.random.normal(k3, (B, S, H), jnp.float32)
    out = jax.block_until_ready(mol2ms_discriminator(hs, w1, b1, w2, b2))
    assert out.shape == (B, 1)
    assert jnp.allclose(out, reference(hs, w1, b1, w2, b2), atol=1e-4, rtol=1e-4)

    print("KERNEL_OK")
</pallas_src>

<mosaic_0001>
module attributes {stable_mosaic.version = 11 : i64} {
  func.func @_pool_kernel(%arg0: i32, %arg1: i32, %arg2: i32, %arg3: memref<2x8x32xf32, #tpu.memory_space<vmem>>, %arg4: memref<1x2x32xf32, #tpu.memory_space<vmem>>) attributes {dimension_semantics = [#tpu.dimension_semantics<parallel>, #tpu.dimension_semantics<parallel>, #tpu.dimension_semantics<arbitrary>], iteration_bounds = array<i64: 2, 1, 1>, scalar_prefetch = 0 : i64, scratch_operands = 0 : i64, tpu.core_type = #tpu.core_type<tc>, window_params = [{transform_indices = @transform_0, window_bounds = array<i64: 2, 8, 32>}, {transform_indices = @transform_1, window_bounds = array<i64: 1, 2, 32>}]} {
    %c1_i32 = arith.constant 1 : i32
    %0 = arith.muli %arg0, %c1_i32 : i32
    %1 = arith.addi %0, %arg2 : i32
    %c0_i32 = arith.constant 0 : i32
    %2 = arith.cmpi eq, %arg2, %c0_i32 : i32
    %3 = arith.extui %2 : i1 to i32
    %c0_i32_0 = arith.constant 0 : i32
    %4 = arith.cmpi ne, %3, %c0_i32_0 : i32
    scf.if %4 {
      %cst = arith.constant 0.000000e+00 : f32
      %11 = vector.broadcast %cst : f32 to vector<2x32xf32>
      %c0 = arith.constant 0 : index
      %c0_5 = arith.constant 0 : index
      %c0_6 = arith.constant 0 : index
      %12 = vector.load %arg4[%c0, %c0_5, %c0_6] : memref<1x2x32xf32, #tpu.memory_space<vmem>>, vector<1x2x32xf32>
      %13 = vector.shape_cast %12 : vector<1x2x32xf32> to vector<2x32xf32>
      %14 = vector.shape_cast %11 : vector<2x32xf32> to vector<1x2x32xf32>
      tpu.vector_store %arg4[%c0, %c0_5, %c0_6], %14 {strides = array<i32>} : memref<1x2x32xf32, #tpu.memory_space<vmem>>, vector<1x2x32xf32>,
    } else {
    }
    %c0_i32_1 = arith.constant 0 : i32
    %5 = arith.cmpi slt, %1, %c0_i32_1 : i32
    %6 = arith.extui %5 : i1 to i32
    %c0_i32_2 = arith.constant 0 : i32
    %7 = arith.cmpi ne, %6, %c0_i32_2 : i32
    scf.if %7 {
      %c0 = arith.constant 0 : index
      %c0_5 = arith.constant 0 : index
      %c0_6 = arith.constant 0 : index
      %11 = vector.load %arg3[%c0, %c0_5, %c0_6] : memref<2x8x32xf32, #tpu.memory_space<vmem>>, vector<2x8x32xf32>
      %c0_7 = arith.constant 0 : index
      %c0_8 = arith.constant 0 : index
      %c0_9 = arith.constant 0 : index
      %12 = vector.load %arg4[%c0_7, %c0_8, %c0_9] : memref<1x2x32xf32, #tpu.memory_space<vmem>>, vector<1x2x32xf32>
      %13 = vector.shape_cast %12 : vector<1x2x32xf32> to vector<2x32xf32>
      %cst = arith.constant dense<0.000000e+00> : vector<2x32xf32>
      %14 = vector.multi_reduction <add>, %11, %cst [1] : vector<2x8x32xf32> to vector<2x32xf32>
      %15 = arith.addf %13, %14 : vector<2x32xf32>
      %c0_10 = arith.constant 0 : index
      %c0_11 = arith.constant 0 : index
      %c0_12 = arith.constant 0 : index
      %16 = vector.load %arg4[%c0_10, %c0_11, %c0_12] : memref<1x2x32xf32, #tpu.memory_space<vmem>>, vector<1x2x32xf32>
      %17 = vector.shape_cast %16 : vector<1x2x32xf32> to vector<2x32xf32>
      %18 = vector.shape_cast %15 : vector<2x32xf32> to vector<1x2x32xf32>
      tpu.vector_store %arg4[%c0_10, %c0_11, %c0_12], %18 {strides = array<i32>} : memref<1x2x32xf32, #tpu.memory_space<vmem>>, vector<1x2x32xf32>,
    } else {
    }
    %c0_i32_3 = arith.constant 0 : i32
    %8 = arith.cmpi sge, %1, %c0_i32_3 : i32
    %9 = arith.extui %8 : i1 to i32
    %c0_i32_4 = arith.constant 0 : i32
    %10 = arith.cmpi ne, %9, %c0_i32_4 : i32
    scf.if %10 {
      %c0 = arith.constant 0 : index
      %c0_5 = arith.constant 0 : index
      %c0_6 = arith.constant 0 : index
      %11 = vector.load %arg3[%c0, %c0_5, %c0_6] : memref<2x8x32xf32, #tpu.memory_space<vmem>>, vector<2x8x32xf32>
      %12 = tpu.iota {dimensions = array<i32: 1>} : vector<1x8x1xi32>
      %c8_i32 = arith.constant 8 : i32
      %13 = arith.muli %1, %c8_i32 : i32
      %14 = vector.broadcast %13 : i32 to vector<1x8x1xi32>
      %15 = arith.addi %14, %12 : vector<1x8x1xi32>
      %c8_i32_7 = arith.constant 8 : i32
      %16 = vector.broadcast %c8_i32_7 : i32 to vector<1x8x1xi32>
      %17 = arith.cmpi slt, %15, %16 : vector<1x8x1xi32>
      %cst = arith.constant 0.000000e+00 : f32
      %18 = vector.broadcast %cst : f32 to vector<2x8x32xf32>
      %19 = vector.shape_cast %17 : vector<1x8x1xi1> to vector<1x8x1xi1>
      %20 = vector.broadcast %19 : vector<1x8x1xi1> to vector<2x8x32xi1>
      %21 = arith.select %20, %11, %18 : vector<2x8x32xi1>, vector<2x8x32xf32>
      %c0_8 = arith.constant 0 : index
      %c0_9 = arith.constant 0 : index
      %c0_10 = arith.constant 0 : index
      %22 = vector.load %arg4[%c0_8, %c0_9, %c0_10] : memref<1x2x32xf32, #tpu.memory_space<vmem>>, vector<1x2x32xf32>
      %23 = vector.shape_cast %22 : vector<1x2x32xf32> to vector<2x32xf32>
      %cst_11 = arith.constant dense<0.000000e+00> : vector<2x32xf32>
      %24 = vector.multi_reduction <add>, %21, %cst_11 [1] : vector<2x8x32xf32> to vector<2x32xf32>
      %25 = arith.addf %23, %24 : vector<2x32xf32>
      %c0_12 = arith.constant 0 : index
      %c0_13 = arith.constant 0 : index
      %c0_14 = arith.constant 0 : index
      %26 = vector.load %arg4[%c0_12, %c0_13, %c0_14] : memref<1x2x32xf32, #tpu.memory_space<vmem>>, vector<1x2x32xf32>
      %27 = vector.shape_cast %26 : vector<1x2x32xf32> to vector<2x32xf32>
      %28 = vector.shape_cast %25 : vector<2x32xf32> to vector<1x2x32xf32>
      tpu.vector_store %arg4[%c0_12, %c0_13, %c0_14], %28 {strides = array<i32>} : memref<1x2x32xf32, #tpu.memory_space<vmem>>, vector<1x2x32xf32>,
    } else {
    }
    return
  }
  func.func @transform_0(%arg0: i32, %arg1: i32, %arg2: i32) -> (i32, i32, i32) {
    %c1_i32 = arith.constant 1 : i32
    %0 = arith.muli %arg0, %c1_i32 : i32
    %1 = arith.addi %0, %arg2 : i32
    %c0_i32 = arith.constant 0 : i32
    %2 = arith.minsi %1, %c0_i32 : i32
    %c0_i32_0 = arith.constant 0 : i32
    %c0_i32_1 = arith.constant 0 : i32
    return %arg1, %2, %c0_i32_0 : i32, i32, i32
  }
  func.func @transform_1(%arg0: i32, %arg1: i32, %arg2: i32) -> (i32, i32, i32) {
    %c0_i32 = arith.constant 0 : i32
    %c0_i32_0 = arith.constant 0 : i32
    return %arg0, %arg1, %c0_i32 : i32, i32, i32
  }
}

</mosaic_0001>

<llo_original>
// kernel: tpu_custom_call.1
$region0: #{tpu_custom_call.1}
  #allocation0 [shape = 'u32[]', space=smem, size = 0x4, offset = 0x4, fixed_abs, tag = 'smem constant byte address 0x4 - core index']
  #allocation1 [shape = 'u32[72,128]{1,0:T(1,128)}', space=vmem, size = 0x9000, scoped, tag = 'internal scratch']
  %s0 = inlined_call_operand.hbm [shape: f32[2,8,32], index: 0, kind: input, shape index: {}]
  %s1 = inlined_call_operand.hbm [shape: f32[2,2,32], index: 1, kind: output, shape index: {}]
  %s2 = sld [smem:[#allocation0]]
  $region53: #{tpu_custom_call.1} parent=0
    _
  %s4 = ssub.s32 1, %s2
  %s5 = scalar_select 0, %s4, %s2
  $region1: #{tpu_custom_call.1} parent=0
    #allocation2 [shape = 'u8[16384]{0}', space=vmem, size = 0x4000, scoped, tag = 'input window, operand 0']
    #allocation3 [shape = 's32[2]{0}', space=sflag, size = 0x8, scoped, tag = 'scoped memory for tpu_custom_call.1']
    #allocation4 [shape = 's32[2]{0}', space=sflag, size = 0x8, scoped, tag = 'scoped memory for tpu_custom_call.1']
    #allocation5 [shape = 'u8[2048]{0}', space=vmem, size = 0x800, scoped, tag = 'output window, operand 0']
    %6 = vsyncpa [#allocation3], 0
    %s7 = scalar_lea.sflag [#allocation3], 1
    %8 = vsyncpa %s7, 0
    %9 = vsyncpa [#allocation4], 0
    %s10 = scalar_lea.sflag [#allocation4], 1
    %11 = vsyncpa %s10, 0
    loop: start=0, step=1, limit=4
    $region2: #{tpu_custom_call.1} parent=1 // loop_pre_header
      _
    $region3: #{tpu_custom_call.1} parent=1 // loop_header
      %s13 = sphi 0, %s17
      %p14 = scmp.ge.s32.totalorder %s13, 4
      %s20 = sphi 0, %s39
      %s21 = sphi 0, %s35
      %s22 = sphi 0, %s31
      %s23 = sphi 0, %s20
      %s24 = sphi 0, %s21
      %s25 = sphi 0, %s22
      %s26 = sphi 0, %s23
      %s27 = sphi 0, %s24
      %s28 = sphi 0, %s25
      %s50 = sphi 0, %s52
      %s53 = sphi 0, %s50
      %s54 = sphi 0, %s53
      %s70 = sphi 0, %s54
      %s78 = sphi 0, %s80
      %s81 = sphi 0, %s78
      %s82 = sphi 0, %s81
      %s98 = sphi 0, %s82
    $region4: #{tpu_custom_call.1} parent=1 // loop_header_branch
      %16 = sbr.rel (%p14) target = $region8
    $region5: #{tpu_custom_call.1} parent=1 // loop_body
      %s18 = ssub.s32 %s13, 1
      %s19 = ssub.s32 %s13, 2
      %s29 = sadd.s32 1, %s22
      %p30 = scmp.ge.s32.totalorder %s29, 1
      %s31 = scalar_select %p30, 0, %s29
      %s32 = sadd.s32 1, %s21
      %s33 = scalar_select %p30, %s32, %s21
      %p34 = scmp.ge.s32.totalorder %s33, 1
      %s35 = scalar_select %p34, 0, %s33
      %s36 = sadd.s32 1, %s20
      %s37 = scalar_select %p34, %s36, %s20
      %p38 = scmp.ge.s32.totalorder %s37, 2
      %s39 = scalar_select %p38, 0, %s37
      %s40 = sadd.s32 %s20, %s22
      %p41 = scmp.lt.s32.totalorder %s40, 0
      %s42 = scalar_select %p41, %s40, 0
      %s43 = sadd.s32 %s39, %s31
      %p44 = scmp.lt.s32.totalorder %s43, 0
      %s45 = scalar_select %p44, %s43, 0
      %s46 = ssub.s32 %s21, %s35
      %s47 = ssub.s32 %s42, %s45
      %s48 = sor.u32 %s46, %s47
      %p49 = scmp.eq.s32.totalorder %s48, 0
      %s51 = sadd.s32 %s50, 1
      %s52 = scalar_select %p49, %s50, %s51
      %p55 = pneg %p49
      %p56 = scmp.eq.s32.totalorder %s13, 1
      %p57 = por %p55, %p56
      %p58 = scmp.ne.s32.totalorder %s50, %s53
      %p59 = scmp.eq.s32.totalorder %s13, 0
      %p60 = por %p58, %p59
      %p61 = scmp.ne.s32.totalorder %s50, %s53
      %p62 = scmp.eq.s32.totalorder %s18, 1
      %p63 = por %p61, %p62
      %p64 = scmp.ne.s32.totalorder %s53, %s54
      %p65 = scmp.eq.s32.totalorder %s18, 0
      %p66 = por %p64, %p65
      %p67 = scmp.ne.s32.totalorder %s53, %s54
      %p68 = scmp.eq.s32.totalorder %s19, 1
      %p69 = por %p67, %p68
      %p71 = scmp.ne.s32.totalorder %s54, %s70
      %p72 = scmp.eq.s32.totalorder %s19, 0
      %p73 = por %p71, %p72
      %s74 = ssub.s32 %s20, %s39
      %s75 = ssub.s32 %s21, %s35
      %s76 = sor.u32 %s74, %s75
      %p77 = scmp.eq.s32.totalorder %s76, 0
      %s79 = sadd.s32 %s78, 1
      %s80 = scalar_select %p77, %s78, %s79
      %p83 = pneg %p77
      %p84 = scmp.eq.s32.totalorder %s13, 1
      %p85 = por %p83, %p84
      %p86 = scmp.ne.s32.totalorder %s78, %s81
      %p87 = scmp.eq.s32.totalorder %s13, 0
      %p88 = por %p86, %p87
      %p89 = scmp.ne.s32.totalorder %s78, %s81
      %p90 = scmp.eq.s32.totalorder %s18, 1
      %p91 = por %p89, %p90
      %p92 = scmp.ne.s32.totalorder %s81, %s82
      %p93 = scmp.eq.s32.totalorder %s18, 0
      %p94 = por %p92, %p93
      %p95 = scmp.ne.s32.totalorder %s81, %s82
      %p96 = scmp.eq.s32.totalorder %s19, 1
      %p97 = por %p95, %p96
      %p99 = scmp.ne.s32.totalorder %s82, %s98
      %p100 = scmp.eq.s32.totalorder %s19, 0
      %p101 = por %p99, %p100
      %p102 = scmp.le.s32.totalorder 1, %s13
      %p103 = scmp.lt.s32.totalorder %s13, 3
      %p104 = pnand %p102, %p103
      %p105 = pneg %p104
      // Predicated region
      $region9: #{tpu_custom_call.1} parent=5 // pred_check
        _
      $region10: #{tpu_custom_call.1} parent=5 // pred_check_branch
        %107 = sbr.rel (%p104) target = $region12
      $region11: #{tpu_custom_call.1} parent=5 // pred_region
        %s108 = ssub.s32 %s13, 1
      $region12: #{tpu_custom_call.1} parent=5 // pred_fallthru
        _
      %p109 = scmp.lt.s32.totalorder %s13, 2
      // Predicated region
      $region13: #{tpu_custom_call.1} parent=5 // pred_check
        %p110 = pneg %p109
      $region14: #{tpu_custom_call.1} parent=5 // pred_check_branch
        %112 = sbr.rel (%p110) target = $region16
      $region15: #{tpu_custom_call.1} parent=5 // pred_region
        // Predicated region
        $region17: #{tpu_custom_call.1} parent=15 // pred_check
          %p113 = pneg %p60
        $region18: #{tpu_custom_call.1} parent=15 // pred_check_branch
          %115 = sbr.rel (%p113) target = $region20
        $region19: #{tpu_custom_call.1} parent=15 // pred_region
          %s116 = sand.u32 %s50, 1
          %s117 = scalar_lea.sflag [#allocation3], %s116
          %s118 = sand.u32 %s50, 1
          %s119 = smul.addr %s118, 16
          %s120 = scalar_lea.vmem [#allocation2], %s119
          %s121 = sadd.s32 %s20, %s22
          %p122 = scmp.lt.s32.totalorder %s121, 0
          %s123 = scalar_select %p122, %s121, 0
          %s124 = smul.u32 2, %s21
          %126 = vsyncadd %s117, 0
          %s127 = sadd.s32 %s123, %s124
          %s128 = smul.addr %s127, 8
          %s129 = scalar_lea.hbm %s0, %s128
          %s130 = sshll.u32 %s129, 4
          %s131 = int_to_ptr.hbm [resolvable:$true] %s130
          %s132 = sshll.u32 %s120, 4
          %s133 = int_to_ptr.vmem [resolvable:$true] %s132
          %138 = dma.hbm_to_vmem [thread:$0]  %s131, 256, %s133, %s117, 128, 128, 8
        $region20: #{tpu_custom_call.1} parent=15 // pred_fallthru
          _
      $region16: #{tpu_custom_call.1} parent=5 // pred_fallthru
        _
      %p139 = scmp.le.s32.totalorder 1, %s13
      %p140 = scmp.lt.s32.totalorder %s13, 3
      %p141 = pnand %p139, %p140
      %p142 = pneg %p141
      // Predicated region
      $region21: #{tpu_custom_call.1} parent=5 // pred_check
        _
      $region22: #{tpu_custom_call.1} parent=5 // pred_check_branch
        %144 = sbr.rel (%p141) target = $region24
      $region23: #{tpu_custom_call.1} parent=5 // pred_region
        %s145 = ssub.s32 %s13, 1
        %s146 = sand.u32 %s53, 1
        %s147 = scalar_lea.sflag [#allocation3], %s146
        %s148 = sand.u32 %s53, 1
        %s149 = smul.addr %s148, 16
        %s150 = scalar_lea.vmem [#allocation2], %s149
        // Predicated region
        $region25: #{tpu_custom_call.1} parent=23 // pred_check
          %p151 = pneg %p66
        $region26: #{tpu_custom_call.1} parent=23 // pred_check_branch
          %153 = sbr.rel (%p151) target = $region28
        $region27: #{tpu_custom_call.1} parent=23 // pred_region
          %155 = dma.done %s147, 256
        $region28: #{tpu_custom_call.1} parent=23 // pred_fallthru
          _
        %s156 = sand.u32 %s53, 1
        %s157 = scalar_lea.sflag [#allocation3], %s156
        %s158 = sand.u32 %s53, 1
        %s159 = smul.addr %s158, 16
        %s160 = scalar_lea.vmem [#allocation2], %s159
        %p161 = pneg %p66
        %p162 = pneg %p63
        %p163 = pneg %p94
        %p164 = pneg %p91
        %s165 = sand.u32 %s81, 1
        %s166 = scalar_lea.sflag [#allocation4], %s165
        %s167 = sand.u32 %s81, 1
        %s168 = smul.addr %s167, 2
        %s169 = scalar_lea.vmem [#allocation5], %s168
        %s170 = sadd.s32 %s23, %s25
        %p171 = scmp.lt.s32.totalorder %s170, 0
        %s172 = scalar_select %p171, %s170, 0
        %s173 = smul.u32 2, %s24
        %s174 = sadd.s32 %s23, %s25
        %p175 = scmp.eq.s32.totalorder %s25, 0
        // Predicated region
        $region29: #{tpu_custom_call.1} parent=23 // pred_check
          %p176 = pneg %p175
        $region30: #{tpu_custom_call.1} parent=23 // pred_check_branch
          %178 = sbr.rel (%p176) target = $region32
        $region31: #{tpu_custom_call.1} parent=23 // pred_region
          %vm179 = vcmask 254976
          %180 = vst.msk [vmem:[%s169] sm:$0x3] %vm179, 0.0
        $region32: #{tpu_custom_call.1} parent=23 // pred_fallthru
          _
        %p181 = scmp.lt.s32.totalorder %s174, 0
        // Predicated region
        $region33: #{tpu_custom_call.1} parent=23 // pred_check
          %p182 = pneg %p181
        $region34: #{tpu_custom_call.1} parent=23 // pred_check_branch
          %184 = sbr.rel (%p182) target = $region36
        $region35: #{tpu_custom_call.1} parent=23 // pred_region
          %v185 = vld [vmem:[%s150] sm:$0xff]
          %v186 = vld [vmem:[%s150 + $0x8] sm:$0xff]
          %v187 = vld [vmem:[%s169] sm:$0x3]
          %vm188 = vcmask 261120
          %v189 = vsel %vm188, %v185, 0.0
          %v190 = vrot.slane %v189, 4
          %v191 = vadd.f32 %v189, %v190
          %v192 = vrot.slane %v191, 2
          %v193 = vadd.f32 %v191, %v192
          %v194 = vrot.slane %v193, 1
          %v195 = vadd.f32 %v193, %v194
          %v196 = vsel %vm188, %v186, 0.0
          %v197 = vrot.slane %v196, 4
          %v198 = vadd.f32 %v196, %v197
          %v199 = vrot.slane %v198, 2
          %v200 = vadd.f32 %v198, %v199
          %v201 = vrot.slane %v200, 1
          %v202 = vadd.f32 %v200, %v201
          %vm205 = vcmask 1041409
          %v206 = vsel %vm205, %v202, %v195
          %v208 = vadd.f32 %v187, %v206
          %vm209 = vcmask 254976
          %210 = vst.msk [vmem:[%s169] sm:$0x3] %vm209, %v208
        $region36: #{tpu_custom_call.1} parent=23 // pred_fallthru
          _
        %p211 = scmp.ge.s32.totalorder %s174, 0
        // Predicated region
        $region37: #{tpu_custom_call.1} parent=23 // pred_check
          %p212 = pneg %p211
        $region38: #{tpu_custom_call.1} parent=23 // pred_check_branch
          %214 = sbr.rel (%p212) target = $region40
        $region39: #{tpu_custom_call.1} parent=23 // pred_region
          %v215 = vld [vmem:[%s150] sm:$0xff]
          %v216 = vld [vmem:[%s150 + $0x8] sm:$0xff]
          %v217 = vlaneseq
          %v218 = vshrl.u32 %v217, 7
          %s219 = smul.u32 %s174, 8
          %v220 = vstv %s219
          %v221 = vadd.s32 %v220, %v218
          %vm222 = vcmp.lt.s32.totalorder %v221, 8
          %v223 = vsel %vm222, 1, 0
          %vm224 = vcmp.eq.s32.totalorder %v223, 1
          %v225 = vsel %vm224, %v215, 0.0
          %v226 = vsel %vm224, %v216, 0.0
          %v227 = vld [vmem:[%s169] sm:$0x3]
          %vm228 = vcmask 261120
          %v229 = vsel %vm228, %v225, 0.0
          %v230 = vrot.slane %v229, 4
          %v231 = vadd.f32 %v229, %v230
          %v232 = vrot.slane %v231, 2
          %v233 = vadd.f32 %v231, %v232
          %v234 = vrot.slane %v233, 1
          %v235 = vadd.f32 %v233, %v234
          %v236 = vsel %vm228, %v226, 0.0
          %v237 = vrot.slane %v236, 4
          %v238 = vadd.f32 %v236, %v237
          %v239 = vrot.slane %v238, 2
          %v240 = vadd.f32 %v238, %v239
          %v241 = vrot.slane %v240, 1
          %v242 = vadd.f32 %v240, %v241
          %vm245 = vcmask 1041409
          %v246 = vsel %vm245, %v242, %v235
          %v248 = vadd.f32 %v227, %v246
          %vm249 = vcmask 254976
          %250 = vst.msk [vmem:[%s169] sm:$0x3] %vm249, %v248
        $region40: #{tpu_custom_call.1} parent=23 // pred_fallthru
          _
        %s251 = sand.u32 %s81, 1
        %s252 = scalar_lea.sflag [#allocation4], %s251
        %s253 = sand.u32 %s81, 1
        %s254 = smul.addr %s253, 2
        %s255 = scalar_lea.vmem [#allocation5], %s254
        // Predicated region
        $region41: #{tpu_custom_call.1} parent=23 // pred_check
          %p256 = pneg %p91
        $region42: #{tpu_custom_call.1} parent=23 // pred_check_branch
          %258 = sbr.rel (%p256) target = $region44
        $region43: #{tpu_custom_call.1} parent=23 // pred_region
          %260 = vsyncadd %s252, 0
          %s261 = sadd.s32 %s24, %s23
          %s262 = smul.addr %s261, 2
          %s263 = scalar_lea.hbm %s1, %s262
          %s265 = sshll.u32 %s255, 4
          %s266 = int_to_ptr.vmem [resolvable:$true] %s265
          %s267 = sshll.u32 %s263, 4
          %s268 = int_to_ptr.hbm [resolvable:$true] %s267
          %270 = dma.vmem_to_hbm [thread:$0]  %s266, 32, %s268, %s252
        $region44: #{tpu_custom_call.1} parent=23 // pred_fallthru
          _
      $region24: #{tpu_custom_call.1} parent=5 // pred_fallthru
        _
      %p271 = scmp.le.s32.totalorder 2, %s13
      // Predicated region
      $region45: #{tpu_custom_call.1} parent=5 // pred_check
        %p272 = pneg %p271
      $region46: #{tpu_custom_call.1} parent=5 // pred_check_branch
        %274 = sbr.rel (%p272) target = $region48
      $region47: #{tpu_custom_call.1} parent=5 // pred_region
        %s275 = ssub.s32 %s13, 2
        // Predicated region
        $region49: #{tpu_custom_call.1} parent=47 // pred_check
          %p276 = pneg %p97
        $region50: #{tpu_custom_call.1} parent=47 // pred_check_branch
          %278 = sbr.rel (%p276) target = $region52
        $region51: #{tpu_custom_call.1} parent=47 // pred_region
          %s279 = sand.u32 %s82, 1
          %s280 = scalar_lea.sflag [#allocation4], %s279
          %s281 = sand.u32 %s82, 1
          %s282 = smul.addr %s281, 2
          %s283 = scalar_lea.vmem [#allocation5], %s282
          %285 = dma.done %s280, 32
        $region52: #{tpu_custom_call.1} parent=47 // pred_fallthru
          _
      $region48: #{tpu_custom_call.1} parent=5 // pred_fallthru
        _
    $region6: #{tpu_custom_call.1} parent=1 // loop_footer
      %s17 = sadd.s32 1, %s13
    $region7: #{tpu_custom_call.1} parent=1 // loop_footer_branch
      %12 = sbr.rel target = $region3
    $region8: #{tpu_custom_call.1} parent=1 // loop_exit
      _
    %286 = vsyncpa [#allocation3], 1
    %s287 = scalar_lea.sflag [#allocation3], 1
    %288 = vsyncpa %s287, 1
    %289 = vsyncpa [#allocation4], 1
    %s290 = scalar_lea.sflag [#allocation4], 1
    %291 = vsyncpa %s290, 1

</llo_original>
